<compile_context>
chip_gen: v7x
topology: tpu7x:2x2x1
jax: 0.10.0
libtpu: 0.0.40
codegen_flags: <defaults>
</compile_context>

<pallas_src>
import functools

import jax
import jax.numpy as jnp
from jax.experimental import pallas as pl
from jax.experimental.pallas import tpu as pltpu


def _pick_col_tile(n: int, cap: int = 8192) -> int:
    """Largest multiple of 128 that divides n and is <= cap; else n itself."""
    if n <= cap or n % 128 != 0:
        return n
    best = 128
    t = 128
    while t <= cap:
        if n % t == 0:
            best = t
        t += 128
    return best


# ---------------------------------------------------------------------------
# Kernel 1: scalar mean-of-std reduction over the flat (G, N) view of x.
# ---------------------------------------------------------------------------
def _std_reduce_kernel(g_ref, s_ref, acc_ref, *, group_size, eps, n_cols):
    j = pl.program_id(0)

    @pl.when(j == 0)
    def _init():
        acc_ref[...] = jnp.zeros_like(acc_ref)

    g = g_ref[...].astype(jnp.float32)                    # (G, TN)
    # Single-pass unbiased variance per column (torch.var(dim=0) default).
    col_sum = jnp.sum(g, axis=0, keepdims=True)           # (1, TN)
    col_sumsq = jnp.sum(g * g, axis=0, keepdims=True)     # (1, TN)
    var = (col_sumsq - col_sum * col_sum * (1.0 / group_size)) * (
        1.0 / (group_size - 1))
    var = jnp.maximum(var, 0.0)                           # guard fp cancellation
    std = jnp.sqrt(var + eps)                             # (1, TN)
    acc_ref[...] = acc_ref[...] + jnp.sum(std)

    @pl.when(j == pl.num_programs(0) - 1)
    def _finalize():
        s_ref[...] = acc_ref[...] * (1.0 / n_cols)


# ---------------------------------------------------------------------------
# Kernel 2: lane-dense pass-through copy + broadcast std channel.
# ---------------------------------------------------------------------------
def _concat_std_kernel(s_ref, x_ref, o_ref, *, num_ch):
    hw = o_ref.shape[-1]
    o_ref[:, :num_ch, :] = x_ref[...].astype(o_ref.dtype)
    o_ref[:, num_ch:num_ch + 1, :] = jnp.full(
        (1, 1, hw), s_ref[0], dtype=o_ref.dtype)


def minibatch_stddev(x, group_size: int = 4, eps: float = 1e-8):
    b, c, h, w = x.shape
    total = b * c * h * w
    assert total % group_size == 0, "total elements must be divisible by group_size"
    hw = h * w
    n_cols = total // group_size
    itemsize = jnp.dtype(x.dtype).itemsize

    # ---- Pass 1: scalar mean-of-std over the flat (G, N) view ----
    grouped = jnp.reshape(x, (group_size, n_cols))  # free row-major view
    tn = _pick_col_tile(n_cols)
    grid_r = n_cols // tn

    reduce_kernel = functools.partial(
        _std_reduce_kernel, group_size=group_size, eps=eps, n_cols=n_cols)
    std_scalar = pl.pallas_call(
        reduce_kernel,
        out_shape=jax.ShapeDtypeStruct((1, 1), jnp.float32),
        grid=(grid_r,),
        in_specs=[pl.BlockSpec((group_size, tn), lambda j: (0, j))],
        out_specs=pl.BlockSpec((1, 1), lambda j: (0, 0)),
        scratch_shapes=[pltpu.VMEM((1, 1), jnp.float32)],
        compiler_params=pltpu.CompilerParams(
            dimension_semantics=("arbitrary",),
            vmem_limit_bytes=32 * 1024 * 1024),
        cost_estimate=pl.CostEstimate(
            flops=4 * total,
            transcendentals=n_cols,
            bytes_accessed=total * itemsize + 4),
    )(grouped)

    # ---- Pass 2: lane-dense copy + std-channel broadcast ----
    x3 = jnp.reshape(x, (b, c, hw))            # free row-major view
    s1 = jnp.reshape(std_scalar, (1,))

    concat_kernel = functools.partial(_concat_std_kernel, num_ch=c)
    out3 = pl.pallas_call(
        concat_kernel,
        out_shape=jax.ShapeDtypeStruct((b, c + 1, hw), x.dtype),
        grid=(b,),
        in_specs=[
            pl.BlockSpec(memory_space=pltpu.MemorySpace.SMEM),   # std scalar
            pl.BlockSpec((1, c, hw), lambda i: (i, 0, 0)),       # per-batch x tile
        ],
        out_specs=pl.BlockSpec((1, c + 1, hw), lambda i: (i, 0, 0)),
        compiler_params=pltpu.CompilerParams(
            dimension_semantics=("parallel",),
            vmem_limit_bytes=32 * 1024 * 1024),
        cost_estimate=pl.CostEstimate(
            flops=0,
            transcendentals=0,
            bytes_accessed=(2 * total + b * hw) * itemsize + 4),
    )(s1, x3)

    return jnp.reshape(out3, (b, c + 1, h, w))


def _reference(x, group_size: int = 4, eps: float = 1e-8):
    g = jnp.reshape(x, (group_size, -1)).astype(jnp.float32)
    var = jnp.var(g, axis=0, ddof=1)            # unbiased, matches torch.var default
    std = jnp.sqrt(var + eps)
    s = jnp.mean(std)
    b, c, h, w = x.shape
    std_map = jnp.broadcast_to(s, (b, 1, h, w)).astype(x.dtype)
    return jnp.concatenate([x, std_map], axis=1)


if __name__ == "__main__":
    key = jax.random.PRNGKey(0)
    B, C, H, W = 2, 4, 16, 16
    x = jax.random.normal(key, (B, C, H, W), dtype=jnp.float32)

    out = minibatch_stddev(x, group_size=4, eps=1e-8)
    out = jax.block_until_ready(out)

    ref = _reference(x, group_size=4, eps=1e-8)
    assert out.shape == (B, C + 1, H, W)
    assert out.dtype == x.dtype
    assert jnp.allclose(out, ref, atol=1e-5, rtol=1e-5)
    print("KERNEL_OK")
</pallas_src>

<mosaic_0001>
module attributes {stable_mosaic.version = 11 : i64} {
  func.func @_std_reduce_kernel(%arg0: i32, %arg1: memref<4x512xf32, #tpu.memory_space<vmem>>, %arg2: memref<1x1xf32, #tpu.memory_space<vmem>>, %arg3: memref<1x1xf32, #tpu.memory_space<vmem>>) attributes {dimension_semantics = [#tpu.dimension_semantics<arbitrary>], iteration_bounds = array<i64: 1>, scalar_prefetch = 0 : i64, scratch_operands = 1 : i64, tpu.core_type = #tpu.core_type<tc>, window_params = [{transform_indices = @transform_0, window_bounds = array<i64: 4, 512>}, {pipeline_mode = #tpu.pipeline_mode<synchronous>, transform_indices = @transform_1, window_bounds = array<i64: 1, 1>}]} {
    %c0_i32 = arith.constant 0 : i32
    %0 = arith.cmpi eq, %arg0, %c0_i32 : i32
    %1 = arith.extui %0 : i1 to i32
    %c0_i32_0 = arith.constant 0 : i32
    %2 = arith.cmpi ne, %1, %c0_i32_0 : i32
    scf.if %2 {
      %cst_14 = arith.constant 0.000000e+00 : f32
      %31 = vector.broadcast %cst_14 : f32 to vector<1x1xf32>
      %c0_15 = arith.constant 0 : index
      %c0_16 = arith.constant 0 : index
      %32 = vector.load %arg3[%c0_15, %c0_16] : memref<1x1xf32, #tpu.memory_space<vmem>>, vector<1x1xf32>
      tpu.vector_store %arg3[%c0_15, %c0_16], %31 {strides = array<i32>} : memref<1x1xf32, #tpu.memory_space<vmem>>, vector<1x1xf32>,
    } else {
    }
    %c0 = arith.constant 0 : index
    %c0_1 = arith.constant 0 : index
    %3 = vector.load %arg1[%c0, %c0_1] : memref<4x512xf32, #tpu.memory_space<vmem>>, vector<4x512xf32>
    %cst = arith.constant dense<0.000000e+00> : vector<512xf32>
    %4 = vector.multi_reduction <add>, %3, %cst [0] : vector<4x512xf32> to vector<512xf32>
    %5 = vector.shape_cast %4 : vector<512xf32> to vector<1x512xf32>
    %6 = arith.mulf %3, %3 : vector<4x512xf32>
    %cst_2 = arith.constant dense<0.000000e+00> : vector<512xf32>
    %7 = vector.multi_reduction <add>, %6, %cst_2 [0] : vector<4x512xf32> to vector<512xf32>
    %8 = vector.shape_cast %7 : vector<512xf32> to vector<1x512xf32>
    %9 = arith.mulf %5, %5 : vector<1x512xf32>
    %cst_3 = arith.constant 2.500000e-01 : f32
    %10 = vector.broadcast %cst_3 : f32 to vector<1x512xf32>
    %11 = arith.mulf %9, %10 : vector<1x512xf32>
    %12 = arith.subf %8, %11 : vector<1x512xf32>
    %cst_4 = arith.constant 0.333333343 : f32
    %13 = vector.broadcast %cst_4 : f32 to vector<1x512xf32>
    %14 = arith.mulf %12, %13 : vector<1x512xf32>
    %cst_5 = arith.constant 0.000000e+00 : f32
    %15 = vector.broadcast %cst_5 : f32 to vector<1x512xf32>
    %16 = arith.maximumf %14, %15 : vector<1x512xf32>
    %cst_6 = arith.constant 9.99999993E-9 : f32
    %17 = vector.broadcast %cst_6 : f32 to vector<1x512xf32>
    %18 = arith.addf %16, %17 : vector<1x512xf32>
    %19 = math.sqrt %18 : vector<1x512xf32>
    %c0_7 = arith.constant 0 : index
    %c0_8 = arith.constant 0 : index
    %20 = vector.load %arg3[%c0_7, %c0_8] : memref<1x1xf32, #tpu.memory_space<vmem>>, vector<1x1xf32>
    %21 = vector.shape_cast %19 : vector<1x512xf32> to vector<1x1x512xf32>
    %cst_9 = arith.constant dense<0.000000e+00> : vector<1xf32>
    %22 = vector.multi_reduction <add>, %21, %cst_9 [1, 2] : vector<1x1x512xf32> to vector<1xf32>
    %23 = vector.shape_cast %22 : vector<1xf32> to vector<1x1x1xf32>
    %24 = vector.extract %23[0, 0, 0] : f32 from vector<1x1x1xf32>
    %25 = vector.broadcast %24 : f32 to vector<1x1xf32>
    %26 = arith.addf %20, %25 : vector<1x1xf32>
    %c0_10 = arith.constant 0 : index
    %c0_11 = arith.constant 0 : index
    %27 = vector.load %arg3[%c0_10, %c0_11] : memref<1x1xf32, #tpu.memory_space<vmem>>, vector<1x1xf32>
    tpu.vector_store %arg3[%c0_10, %c0_11], %26 {strides = array<i32>} : memref<1x1xf32, #tpu.memory_space<vmem>>, vector<1x1xf32>,
    %c0_i32_12 = arith.constant 0 : i32
    %28 = arith.cmpi eq, %arg0, %c0_i32_12 : i32
    %29 = arith.extui %28 : i1 to i32
    %c0_i32_13 = arith.constant 0 : i32
    %30 = arith.cmpi ne, %29, %c0_i32_13 : i32
    scf.if %30 {
      %c0_14 = arith.constant 0 : index
      %c0_15 = arith.constant 0 : index
      %31 = vector.load %arg3[%c0_14, %c0_15] : memref<1x1xf32, #tpu.memory_space<vmem>>, vector<1x1xf32>
      %cst_16 = arith.constant 0.001953125 : f32
      %32 = vector.broadcast %cst_16 : f32 to vector<1x1xf32>
      %33 = arith.mulf %31, %32 : vector<1x1xf32>
      %c0_17 = arith.constant 0 : index
      %c0_18 = arith.constant 0 : index
      %34 = vector.load %arg2[%c0_17, %c0_18] : memref<1x1xf32, #tpu.memory_space<vmem>>, vector<1x1xf32>
      tpu.vector_store %arg2[%c0_17, %c0_18], %33 {strides = array<i32>} : memref<1x1xf32, #tpu.memory_space<vmem>>, vector<1x1xf32>,
    } else {
    }
    return
  }
  func.func @transform_0(%arg0: i32) -> (i32, i32) {
    %c0_i32 = arith.constant 0 : i32
    %c0_i32_0 = arith.constant 0 : i32
    return %c0_i32, %arg0 : i32, i32
  }
  func.func @transform_1(%arg0: i32) -> (i32, i32) {
    %c0_i32 = arith.constant 0 : i32
    %c0_i32_0 = arith.constant 0 : i32
    %c0_i32_1 = arith.constant 0 : i32
    return %c0_i32, %c0_i32_0 : i32, i32
  }
}

</mosaic_0001>

<llo_original>
// kernel: tpu_custom_call.1
$region0: #{tpu_custom_call.1}
  #allocation0 [shape = 'u32[]', space=smem, size = 0x4, offset = 0x4, fixed_abs, tag = 'smem constant byte address 0x4 - core index']
  #allocation1 [shape = 'u32[144,128]{1,0:T(1,128)}', space=vmem, size = 0x12000, scoped, tag = 'internal scratch']
  #allocation2 [shape = 'f32[1,1]{1,0:T(1,128)}', space=vmem, size = 0x200, scoped, tag = 'scratch operand']
  %s0 = inlined_call_operand.hbm [shape: f32[4,512], index: 0, kind: input, shape index: {}]
  %s1 = inlined_call_operand.hbm [shape: f32[1,1], index: 1, kind: output, shape index: {}]
  %s2 = sld [smem:[#allocation0]]
  $region26: #{tpu_custom_call.1} parent=0
    _
  %s4 = ssub.s32 1, %s2
  %s5 = scalar_select 0, %s4, %s2
  $region1: #{tpu_custom_call.1} parent=0
    #allocation3 [shape = 'u8[8192]{0}', space=vmem, size = 0x2000, scoped, tag = 'input window, operand 0, single buffered']
    #allocation4 [shape = 's32[1]{0}', space=sflag, size = 0x4, scoped, tag = 'scoped memory for tpu_custom_call.1']
    #allocation5 [shape = 's32[1]{0}', space=sflag, size = 0x4, scoped, tag = 'scoped memory for tpu_custom_call.1']
    #allocation6 [shape = 'u8[512]{0}', space=vmem, size = 0x400, scoped, tag = 'output window, operand 0, single buffered']
    %6 = vsyncpa [#allocation4], 0
    %7 = vsyncpa [#allocation5], 0
    // Predicated region
    $region2: #{tpu_custom_call.1} parent=1 // pred_check
      _
    $region3: #{tpu_custom_call.1} parent=1 // pred_check_branch
      %9 = sbr.rel (0) target = $region5
    $region4: #{tpu_custom_call.1} parent=1 // pred_region
      %s11 = ssub.s32 256, 256
      %12 = vsyncadd [#allocation4], %s11
      %s14 = sshll.u32 [#allocation3], 4
      %s15 = int_to_ptr.vmem [resolvable:$true] %s14
      %17 = dma.hbm_to_vmem [thread:$0]  %s0, 256, %s15, [#allocation4]
    $region5: #{tpu_custom_call.1} parent=1 // pred_fallthru
      _
    // Predicated region
    $region6: #{tpu_custom_call.1} parent=1 // pred_check
      _
    $region7: #{tpu_custom_call.1} parent=1 // pred_check_branch
      %19 = sbr.rel (0) target = $region9
    $region8: #{tpu_custom_call.1} parent=1 // pred_region
      %20 = dma.done [#allocation4], 256
    $region9: #{tpu_custom_call.1} parent=1 // pred_fallthru
      _
    %p21 = scmp.eq.s32.totalorder 0, 0
    // Predicated region
    $region10: #{tpu_custom_call.1} parent=1 // pred_check
      %p22 = pneg %p21
    $region11: #{tpu_custom_call.1} parent=1 // pred_check_branch
      %24 = sbr.rel (%p22) target = $region13
    $region12: #{tpu_custom_call.1} parent=1 // pred_region
      %vm25 = vcmask 0
      %26 = vst.msk [vmem:[#allocation2] sm:$0x1] %vm25, 0.0
    $region13: #{tpu_custom_call.1} parent=1 // pred_fallthru
      _
    %v27 = vld [vmem:[#allocation3] sm:$0xff]
    %v28 = vld [vmem:[#allocation3 + $0x8] sm:$0xff]
    %v31 = vcombine.high %v27, %v27
    %v32 = vcombine.high %v28, %v28
    %vm35 = vcmask 1043456
    %v36 = vsel %vm35, %v27, 0.0
    %v37 = vrot.slane %v36, 4
    %v38 = vadd.f32 %v36, %v37
    %v39 = vrot.slane %v38, 2
    %v40 = vadd.f32 %v38, %v39
    %v41 = vrot.slane %v40, 1
    %v42 = vadd.f32 %v40, %v41
    %v43 = vsel %vm35, %v31, 0.0
    %v44 = vrot.slane %v43, 4
    %v45 = vadd.f32 %v43, %v44
    %v46 = vrot.slane %v45, 2
    %v47 = vadd.f32 %v45, %v46
    %v48 = vrot.slane %v47, 1
    %v49 = vadd.f32 %v47, %v48
    %v50 = vsel %vm35, %v28, 0.0
    %v51 = vrot.slane %v50, 4
    %v52 = vadd.f32 %v50, %v51
    %v53 = vrot.slane %v52, 2
    %v54 = vadd.f32 %v52, %v53
    %v55 = vrot.slane %v54, 1
    %v56 = vadd.f32 %v54, %v55
    %v57 = vsel %vm35, %v32, 0.0
    %v58 = vrot.slane %v57, 4
    %v59 = vadd.f32 %v57, %v58
    %v60 = vrot.slane %v59, 2
    %v61 = vadd.f32 %v59, %v60
    %v62 = vrot.slane %v61, 1
    %v63 = vadd.f32 %v61, %v62
    %v64 = vmul.f32 %v27, %v27
    %v65 = vmul.f32 %v28, %v28
    %v68 = vcombine.high %v64, %v64
    %v69 = vcombine.high %v65, %v65
    %v72 = vsel %vm35, %v64, 0.0
    %v73 = vrot.slane %v72, 4
    %v74 = vadd.f32 %v72, %v73
    %v75 = vrot.slane %v74, 2
    %v76 = vadd.f32 %v74, %v75
    %v77 = vrot.slane %v76, 1
    %v78 = vadd.f32 %v76, %v77
    %v79 = vsel %vm35, %v68, 0.0
    %v80 = vrot.slane %v79, 4
    %v81 = vadd.f32 %v79, %v80
    %v82 = vrot.slane %v81, 2
    %v83 = vadd.f32 %v81, %v82
    %v84 = vrot.slane %v83, 1
    %v85 = vadd.f32 %v83, %v84
    %v86 = vsel %vm35, %v65, 0.0
    %v87 = vrot.slane %v86, 4
    %v88 = vadd.f32 %v86, %v87
    %v89 = vrot.slane %v88, 2
    %v90 = vadd.f32 %v88, %v89
    %v91 = vrot.slane %v90, 1
    %v92 = vadd.f32 %v90, %v91
    %v93 = vsel %vm35, %v69, 0.0
    %v94 = vrot.slane %v93, 4
    %v95 = vadd.f32 %v93, %v94
    %v96 = vrot.slane %v95, 2
    %v97 = vadd.f32 %v95, %v96
    %v98 = vrot.slane %v97, 1
    %v99 = vadd.f32 %v97, %v98
    %v100 = vmul.f32 %v42, %v42
    %v101 = vmul.f32 %v49, %v49
    %v102 = vmul.f32 %v56, %v56
    %v103 = vmul.f32 %v63, %v63
    %v104 = vmul.f32 %v100, 0.25
    %v105 = vmul.f32 %v101, 0.25
    %v106 = vmul.f32 %v102, 0.25
    %v107 = vmul.f32 %v103, 0.25
    %v108 = vsub.f32 %v78, %v104
    %v109 = vsub.f32 %v85, %v105
    %v110 = vsub.f32 %v92, %v106
    %v111 = vsub.f32 %v99, %v107
    %v112 = vmul.f32 %v108, 0.33333334
    %v113 = vmul.f32 %v109, 0.33333334
    %v114 = vmul.f32 %v110, 0.33333334
    %v115 = vmul.f32 %v111, 0.33333334
    %v116 = vmax.f32 %v112, 0.0
    %v117 = vmax.f32 %v113, 0.0
    %v118 = vmax.f32 %v114, 0.0
    %v119 = vmax.f32 %v115, 0.0
    %v120 = vadd.f32 %v116, 1e-08
    %v121 = vadd.f32 %v117, 1e-08
    %v122 = vadd.f32 %v118, 1e-08
    %v123 = vadd.f32 %v119, 1e-08
    %v124 = vrsqrt.pop %v120
    %v125 = vmul.f32 %v120, %v124
    %vm126 = vcmp.eq.f32.partialorder %v120, inf
    %v127 = vsel %vm126, %v120, %v125
    %vm128 = vcmp.eq.f32.partialorder %v120, 0.0
    %v129 = vand.u32 %v120, 2147483648
    %v130 = vsel %vm128, %v129, %v127
    %v131 = vrsqrt.pop %v121
    %v132 = vmul.f32 %v121, %v131
    %vm133 = vcmp.eq.f32.partialorder %v121, inf
    %v134 = vsel %vm133, %v121, %v132
    %vm135 = vcmp.eq.f32.partialorder %v121, 0.0
    %v136 = vand.u32 %v121, 2147483648
    %v137 = vsel %vm135, %v136, %v134
    %v138 = vrsqrt.pop %v122
    %v139 = vmul.f32 %v122, %v138
    %vm140 = vcmp.eq.f32.partialorder %v122, inf
    %v141 = vsel %vm140, %v122, %v139
    %vm142 = vcmp.eq.f32.partialorder %v122, 0.0
    %v143 = vand.u32 %v122, 2147483648
    %v144 = vsel %vm142, %v143, %v141
    %v145 = vrsqrt.pop %v123
    %v146 = vmul.f32 %v123, %v145
    %vm147 = vcmp.eq.f32.partialorder %v123, inf
    %v148 = vsel %vm147, %v123, %v146
    %vm149 = vcmp.eq.f32.partialorder %v123, 0.0
    %v150 = vand.u32 %v123, 2147483648
    %v151 = vsel %vm149, %v150, %v148
    %v152 = vld [vmem:[#allocation2] sm:$0x1]
    %vm153 = vcmask 1040384
    %v154 = vsel %vm153, %v130, 0.0
    %v155 = vsel %vm153, %v137, 0.0
    %v156 = vadd.f32 %v154, %v155
    %v157 = vsel %vm153, %v144, 0.0
    %v158 = vadd.f32 %v156, %v157
    %v159 = vsel %vm153, %v151, 0.0
    %v160 = vadd.f32 %v158, %v159
    %161 = vadd.xlane.f32.xlu0 %v160
    %v162 = vpop.xlane.xlu0 %161
    %v163 = vrot.slane %v162, 4
    %v164 = vadd.f32 %v162, %v163
    %v165 = vrot.slane %v164, 2
    %v166 = vadd.f32 %v164, %v165
    %v167 = vrot.slane %v166, 1
    %v168 = vadd.f32 %v166, %v167
    %s169 = vtos %v168
    %v170 = vstv %s169
    %v171 = vadd.f32 %v152, %v170
    %vm172 = vcmask 0
    %173 = vst.msk [vmem:[#allocation2] sm:$0x1] %vm172, %v171
    // Predicated region
    $region14: #{tpu_custom_call.1} parent=1 // pred_check
      %p174 = pneg %p21
    $region15: #{tpu_custom_call.1} parent=1 // pred_check_branch
      %176 = sbr.rel (%p174) target = $region17
    $region16: #{tpu_custom_call.1} parent=1 // pred_region
      %v177 = vld [vmem:[#allocation2] sm:$0x1]
      %v178 = vmul.f32 %v177, 0.001953125
      %179 = vst.msk [vmem:[#allocation6] sm:$0x1] %vm172, %v178
    $region17: #{tpu_custom_call.1} parent=1 // pred_fallthru
      _
    // Predicated region
    $region18: #{tpu_custom_call.1} parent=1 // pred_check
      _
    $region19: #{tpu_custom_call.1} parent=1 // pred_check_branch
      %181 = sbr.rel (0) target = $region21
    $region20: #{tpu_custom_call.1} parent=1 // pred_region
      %s183 = ssub.s32 16, 16
      %184 = vsyncadd [#allocation5], %s183
      %s186 = sshll.u32 [#allocation6], 4
      %s187 = int_to_ptr.vmem [resolvable:$true] %s186
      %189 = dma.vmem_to_hbm [thread:$0]  %s187, 16, %s1, [#allocation5]
    $region21: #{tpu_custom_call.1} parent=1 // pred_fallthru
      _
    // Predicated region
    $region22: #{tpu_custom_call.1} parent=1 // pred_check
      _
    $region23: #{tpu_custom_call.1} parent=1 // pred_check_branch
      %191 = sbr.rel (0) target = $region25
    $region24: #{tpu_custom_call.1} parent=1 // pred_region
      %192 = dma.done [#allocation5], 16
    $region25: #{tpu_custom_call.1} parent=1 // pred_fallthru
      _
    %193 = vsyncpa [#allocation4], 1
    %194 = vsyncpa [#allocation5], 1

</llo_original>
